<compile_context>
chip_gen: v6e
topology: v6e:2x2x1
jax: 0.10.0
libtpu: 0.0.40
codegen_flags: <defaults>
</compile_context>

<pallas_src>
import functools

import jax
import jax.numpy as jnp
from jax.experimental import pallas as pl
from jax.experimental.pallas import tpu as pltpu


# ------------------------------ kernel helpers ------------------------------

def _topk_select_cols(r, k):
    """Per-head top-k membership over the rollout CLS row.

    r: [H, N] rollout values (column 0 = CLS token, columns 1.. = patch tokens).
    Returns [1, N] float32: 1.0 where column c (c >= 1) is in the per-head top-k
    for ANY head. Tie-break: lower column index wins (deterministic).
    """
    H, N = r.shape
    col = jax.lax.broadcasted_iota(jnp.int32, (H, N), 1)
    vals = jnp.where(col == 0, -jnp.inf, r)             # CLS column never selectable
    vj = vals[:, None, :]                               # [H, 1, N] candidates j (lanes)
    vm = vals[:, :, None]                               # [H, N, 1] positions  m (sublanes)
    cj = col[:, None, :]
    cm = col[:, :, None]
    better = (vj > vm) | ((vj == vm) & (cj < cm))       # j outranks m
    rank = jnp.sum(better.astype(jnp.int32), axis=-1)   # [H, N]
    sel = (rank < k).astype(jnp.float32)                # [H, N]
    return jnp.max(sel, axis=0, keepdims=True)          # OR over heads -> [1, N]


def _sfts_kernel(rgb_ref, tir_ref, out_ref, acc_rgb, acc_tir, *, k):
    # rgb_ref / tir_ref : [H, N, N] attention map of layer (L-1 - l)  (reversed order)
    # out_ref           : [2, N]   row 0 = "not selected", row 1 = "selected"
    # acc_*             : [H, N]   running CLS-row vector r = e0^T x[L-1] ... x[L-1-l]
    l = pl.program_id(1)
    H, N, _ = rgb_ref.shape

    @pl.when(l == 0)
    def _init():
        e0 = (jax.lax.broadcasted_iota(jnp.int32, (H, N), 1) == 0).astype(jnp.float32)
        acc_rgb[...] = e0
        acc_tir[...] = e0

    # r <- r @ x  as broadcast-multiply + sublane reduce (exact f32 on the VPU; a
    # 1-row MXU op would waste 127/128 of the systolic array and is not the bottleneck
    # since the kernel is HBM-bound).
    acc_rgb[...] = jnp.sum(acc_rgb[...][:, :, None] * rgb_ref[...], axis=1)
    acc_tir[...] = jnp.sum(acc_tir[...][:, :, None] * tir_ref[...], axis=1)

    @pl.when(l == pl.num_programs(1) - 1)
    def _finalize():
        sel_col = jnp.maximum(_topk_select_cols(acc_rgb[...], k),
                              _topk_select_cols(acc_tir[...], k))        # [1, N]
        # mask slot j <- rollout column j+1 ; slot N-1 is never selected.
        sel_slot = jnp.concatenate(
            [sel_col[:, 1:], jnp.zeros((1, 1), jnp.float32)], axis=1)    # [1, N]
        out_ref[0:1, :] = 1.0 - sel_slot
        out_ref[1:2, :] = sel_slot


# --------------------------------- wrapper ----------------------------------

def sfts_pallas(rgb_attn, tir_attn, ratio=0.5):
    """rgb_attn / tir_attn: lists of [B, H, N, N] attention maps (one per layer).

    Returns mask [B, N, 2] float32 (selected -> [0,1], not selected -> [1,0]).
    """
    # TODO(synk): if the producer can emit a pre-stacked [L,B,H,N,N] array, pass it
    # directly — these stacks cost one extra HBM write+read of the inputs.
    rgb = jnp.stack(rgb_attn, axis=0).astype(jnp.float32)   # [L, B, H, N, N]
    tir = jnp.stack(tir_attn, axis=0).astype(jnp.float32)   # [L, B, H, N, N]
    L, B, H, N, _ = rgb.shape
    k = int(N * ratio)

    kernel = functools.partial(_sfts_kernel, k=k)
    layer_map = lambda b, l: (L - 1 - l, b, 0, 0, 0)        # stream layers in reverse

    bytes_in = 2 * L * B * H * N * N * 4
    cost = pl.CostEstimate(
        flops=2 * 2 * L * B * H * N * N + 2 * 2 * B * H * N * N,
        transcendentals=0,
        bytes_accessed=bytes_in + B * 2 * N * 4,
    )

    out = pl.pallas_call(
        kernel,
        out_shape=jax.ShapeDtypeStruct((B, 2, N), jnp.float32),
        grid=(B, L),
        in_specs=[
            pl.BlockSpec((None, None, H, N, N), layer_map),   # layer/batch dims squeezed
            pl.BlockSpec((None, None, H, N, N), layer_map),
        ],
        out_specs=pl.BlockSpec((None, 2, N), lambda b, l: (b, 0, 0)),
        scratch_shapes=[pltpu.VMEM((H, N), jnp.float32),      # rgb CLS-row accumulator
                        pltpu.VMEM((H, N), jnp.float32)],     # tir CLS-row accumulator
        compiler_params=pltpu.CompilerParams(
            dimension_semantics=("parallel", "arbitrary")),
        cost_estimate=cost,
    )(rgb, tir)

    return jnp.transpose(out, (0, 2, 1))                     # [B, N, 2]


# ---------------------------- pure-JAX reference -----------------------------

def _rollout_vals_ref(attn_list):
    last = attn_list[0]
    for i in range(1, len(attn_list)):
        last = jnp.einsum('bhij,bhjk->bhik', attn_list[i], last,
                          precision=jax.lax.Precision.HIGHEST)
    return last[:, :, 0, 1:]                                  # [B, H, N-1]


def _select_ref(vals, N, ratio):
    k = int(N * ratio)
    _, idx = jax.lax.top_k(vals, k)                           # [B, H, k]
    onehot = jax.nn.one_hot(idx, N, dtype=jnp.bool_)          # [B, H, k, N]
    return jnp.any(onehot, axis=(1, 2))                       # [B, N]


def sfts_ref(rgb_attn, tir_attn, ratio=0.5):
    N = rgb_attn[0].shape[2]
    v_rgb = _rollout_vals_ref(rgb_attn)
    v_tir = _rollout_vals_ref(tir_attn)
    idx = _select_ref(v_rgb, N, ratio) | _select_ref(v_tir, N, ratio)
    res_t = jnp.array([0.0, 1.0], jnp.float32)
    res_f = jnp.array([1.0, 0.0], jnp.float32)
    return jnp.where(idx[..., None], res_t, res_f), (v_rgb, v_tir)   # [B, N, 2], vals


def _check_mask(mask, ref_mask, rollout_vals, k, rtol=1e-4):
    """Exact match, except flips are tolerated at positions whose rollout value lies
    within rtol of the per-(batch, head) k-th-largest threshold (different but
    mathematically equivalent matmul associations can legitimately flip such ties)."""
    mismatch = jnp.any(mask != ref_mask, axis=-1)             # [B, N]
    if not bool(jnp.any(mismatch)):
        return True
    B, N, _ = mask.shape
    near_any = jnp.zeros((B, N), dtype=bool)
    for vals in rollout_vals:                                 # vals: [B, H, N-1]
        thr = jnp.sort(vals, axis=-1)[..., -k]                # k-th largest, [B, H]
        near = jnp.abs(vals - thr[..., None]) <= rtol * jnp.abs(thr[..., None]) + 1e-30
        near = jnp.any(near, axis=1)                          # [B, N-1]
        near = jnp.pad(near, ((0, 0), (0, 1)))                # slot N-1 never selected
        near_any = near_any | near
    return bool(jnp.all(near_any | ~mismatch))


# ----------------------------------- main ------------------------------------

if __name__ == "__main__":
    key = jax.random.PRNGKey(0)
    L, B, H, N = 3, 2, 4, 8          # layers, batch, heads, tokens
    ratio = 0.5
    k = int(N * ratio)

    keys = jax.random.split(key, 2 * L)
    rgb_attn = [jax.random.uniform(keys[i], (B, H, N, N), dtype=jnp.float32)
                for i in range(L)]
    tir_attn = [jax.random.uniform(keys[L + i], (B, H, N, N), dtype=jnp.float32)
                for i in range(L)]

    mask = sfts_pallas(rgb_attn, tir_attn, ratio=ratio)
    mask = jax.block_until_ready(mask)

    ref_mask, (v_rgb, v_tir) = sfts_ref(rgb_attn, tir_attn, ratio=ratio)

    assert mask.shape == (B, N, 2) and mask.dtype == jnp.float32
    assert bool(jnp.all(jnp.sum(mask, axis=-1) == 1.0)), "mask rows must be one-hot"
    assert _check_mask(mask, ref_mask, [v_rgb, v_tir], k), \
        "Pallas SFTS mask mismatch vs reference (beyond top-k tie tolerance)"

    print("KERNEL_OK")
</pallas_src>

<mosaic_0001>
module attributes {stable_mosaic.version = 11 : i64} {
  func.func @_sfts_kernel(%arg0: i32, %arg1: i32, %arg2: memref<1x1x4x8x8xf32, #tpu.memory_space<vmem>>, %arg3: memref<1x1x4x8x8xf32, #tpu.memory_space<vmem>>, %arg4: memref<1x2x8xf32, #tpu.memory_space<vmem>>, %arg5: memref<4x8xf32, #tpu.memory_space<vmem>>, %arg6: memref<4x8xf32, #tpu.memory_space<vmem>>) attributes {dimension_semantics = [#tpu.dimension_semantics<parallel>, #tpu.dimension_semantics<arbitrary>], iteration_bounds = array<i64: 2, 3>, scalar_prefetch = 0 : i64, scratch_operands = 2 : i64, tpu.core_type = #tpu.core_type<tc>, window_params = [{transform_indices = @transform_0, window_bounds = array<i64: 1, 1, 4, 8, 8>}, {transform_indices = @transform_1, window_bounds = array<i64: 1, 1, 4, 8, 8>}, {transform_indices = @transform_2, window_bounds = array<i64: 1, 2, 8>}]} {
    %c0_i32 = arith.constant 0 : i32
    %0 = arith.cmpi eq, %arg1, %c0_i32 : i32
    %1 = arith.extui %0 : i1 to i32
    %c0_i32_0 = arith.constant 0 : i32
    %2 = arith.cmpi ne, %1, %c0_i32_0 : i32
    scf.if %2 {
      %22 = tpu.iota {dimensions = array<i32: 1>} : vector<4x8xi32>
      %c0_i32_20 = arith.constant 0 : i32
      %23 = vector.broadcast %c0_i32_20 : i32 to vector<4x8xi32>
      %24 = arith.cmpi eq, %22, %23 : vector<4x8xi32>
      %25 = arith.extui %24 : vector<4x8xi1> to vector<4x8xi32>
      %26 = arith.sitofp %25 : vector<4x8xi32> to vector<4x8xf32>
      %c0_21 = arith.constant 0 : index
      %c0_22 = arith.constant 0 : index
      %27 = vector.load %arg5[%c0_21, %c0_22] : memref<4x8xf32, #tpu.memory_space<vmem>>, vector<4x8xf32>
      tpu.vector_store %arg5[%c0_21, %c0_22], %26 {strides = array<i32>} : memref<4x8xf32, #tpu.memory_space<vmem>>, vector<4x8xf32>,
      %c0_23 = arith.constant 0 : index
      %c0_24 = arith.constant 0 : index
      %28 = vector.load %arg6[%c0_23, %c0_24] : memref<4x8xf32, #tpu.memory_space<vmem>>, vector<4x8xf32>
      tpu.vector_store %arg6[%c0_23, %c0_24], %26 {strides = array<i32>} : memref<4x8xf32, #tpu.memory_space<vmem>>, vector<4x8xf32>,
    } else {
    }
    %c0 = arith.constant 0 : index
    %c0_1 = arith.constant 0 : index
    %3 = vector.load %arg5[%c0, %c0_1] : memref<4x8xf32, #tpu.memory_space<vmem>>, vector<4x8xf32>
    %4 = vector.shape_cast %3 : vector<4x8xf32> to vector<4x8x1xf32>
    %c0_2 = arith.constant 0 : index
    %c0_3 = arith.constant 0 : index
    %c0_4 = arith.constant 0 : index
    %c0_5 = arith.constant 0 : index
    %c0_6 = arith.constant 0 : index
    %5 = vector.load %arg2[%c0_2, %c0_3, %c0_4, %c0_5, %c0_6] : memref<1x1x4x8x8xf32, #tpu.memory_space<vmem>>, vector<1x1x4x8x8xf32>
    %6 = vector.shape_cast %5 : vector<1x1x4x8x8xf32> to vector<4x8x8xf32>
    %7 = vector.broadcast %4 : vector<4x8x1xf32> to vector<4x8x8xf32>
    %8 = arith.mulf %7, %6 : vector<4x8x8xf32>
    %cst = arith.constant dense<0.000000e+00> : vector<4x8xf32>
    %9 = vector.multi_reduction <add>, %8, %cst [1] : vector<4x8x8xf32> to vector<4x8xf32>
    %c0_7 = arith.constant 0 : index
    %c0_8 = arith.constant 0 : index
    %10 = vector.load %arg5[%c0_7, %c0_8] : memref<4x8xf32, #tpu.memory_space<vmem>>, vector<4x8xf32>
    tpu.vector_store %arg5[%c0_7, %c0_8], %9 {strides = array<i32>} : memref<4x8xf32, #tpu.memory_space<vmem>>, vector<4x8xf32>,
    %c0_9 = arith.constant 0 : index
    %c0_10 = arith.constant 0 : index
    %11 = vector.load %arg6[%c0_9, %c0_10] : memref<4x8xf32, #tpu.memory_space<vmem>>, vector<4x8xf32>
    %12 = vector.shape_cast %11 : vector<4x8xf32> to vector<4x8x1xf32>
    %c0_11 = arith.constant 0 : index
    %c0_12 = arith.constant 0 : index
    %c0_13 = arith.constant 0 : index
    %c0_14 = arith.constant 0 : index
    %c0_15 = arith.constant 0 : index
    %13 = vector.load %arg3[%c0_11, %c0_12, %c0_13, %c0_14, %c0_15] : memref<1x1x4x8x8xf32, #tpu.memory_space<vmem>>, vector<1x1x4x8x8xf32>
    %14 = vector.shape_cast %13 : vector<1x1x4x8x8xf32> to vector<4x8x8xf32>
    %15 = vector.broadcast %12 : vector<4x8x1xf32> to vector<4x8x8xf32>
    %16 = arith.mulf %15, %14 : vector<4x8x8xf32>
    %cst_16 = arith.constant dense<0.000000e+00> : vector<4x8xf32>
    %17 = vector.multi_reduction <add>, %16, %cst_16 [1] : vector<4x8x8xf32> to vector<4x8xf32>
    %c0_17 = arith.constant 0 : index
    %c0_18 = arith.constant 0 : index
    %18 = vector.load %arg6[%c0_17, %c0_18] : memref<4x8xf32, #tpu.memory_space<vmem>>, vector<4x8xf32>
    tpu.vector_store %arg6[%c0_17, %c0_18], %17 {strides = array<i32>} : memref<4x8xf32, #tpu.memory_space<vmem>>, vector<4x8xf32>,
    %c2_i32 = arith.constant 2 : i32
    %19 = arith.cmpi eq, %arg1, %c2_i32 : i32
    %20 = arith.extui %19 : i1 to i32
    %c0_i32_19 = arith.constant 0 : i32
    %21 = arith.cmpi ne, %20, %c0_i32_19 : i32
    scf.if %21 {
      %c0_20 = arith.constant 0 : index
      %c0_21 = arith.constant 0 : index
      %22 = vector.load %arg5[%c0_20, %c0_21] : memref<4x8xf32, #tpu.memory_space<vmem>>, vector<4x8xf32>
      %23 = tpu.iota {dimensions = array<i32: 1>} : vector<4x8xi32>
      %c0_i32_22 = arith.constant 0 : i32
      %24 = vector.broadcast %c0_i32_22 : i32 to vector<4x8xi32>
      %25 = arith.cmpi eq, %23, %24 : vector<4x8xi32>
      %cst_23 = arith.constant 0xFF800000 : f32
      %26 = vector.broadcast %cst_23 : f32 to vector<4x8xf32>
      %27 = arith.select %25, %26, %22 : vector<4x8xi1>, vector<4x8xf32>
      %28 = vector.shape_cast %27 : vector<4x8xf32> to vector<4x1x8xf32>
      %29 = vector.shape_cast %27 : vector<4x8xf32> to vector<4x8x1xf32>
      %30 = vector.shape_cast %23 : vector<4x8xi32> to vector<4x1x8xi32>
      %31 = vector.shape_cast %23 : vector<4x8xi32> to vector<4x8x1xi32>
      %32 = vector.broadcast %28 : vector<4x1x8xf32> to vector<4x8x8xf32>
      %33 = vector.broadcast %29 : vector<4x8x1xf32> to vector<4x8x8xf32>
      %34 = arith.cmpf ogt, %32, %33 : vector<4x8x8xf32>
      %35 = vector.broadcast %28 : vector<4x1x8xf32> to vector<4x8x8xf32>
      %36 = vector.broadcast %29 : vector<4x8x1xf32> to vector<4x8x8xf32>
      %37 = arith.cmpf oeq, %35, %36 : vector<4x8x8xf32>
      %38 = vector.broadcast %30 : vector<4x1x8xi32> to vector<4x8x8xi32>
      %39 = vector.broadcast %31 : vector<4x8x1xi32> to vector<4x8x8xi32>
      %40 = arith.cmpi slt, %38, %39 : vector<4x8x8xi32>
      %41 = arith.andi %37, %40 : vector<4x8x8xi1>
      %42 = arith.ori %34, %41 : vector<4x8x8xi1>
      %43 = arith.extui %42 : vector<4x8x8xi1> to vector<4x8x8xi32>
      %cst_24 = arith.constant dense<0> : vector<4x8xi32>
      %44 = vector.multi_reduction <add>, %43, %cst_24 [2] : vector<4x8x8xi32> to vector<4x8xi32>
      %c4_i32 = arith.constant 4 : i32
      %45 = vector.broadcast %c4_i32 : i32 to vector<4x8xi32>
      %46 = arith.cmpi slt, %44, %45 : vector<4x8xi32>
      %47 = arith.extui %46 : vector<4x8xi1> to vector<4x8xi32>
      %48 = arith.sitofp %47 : vector<4x8xi32> to vector<4x8xf32>
      %cst_25 = arith.constant dense<0xFF800000> : vector<8xf32>
      %49 = vector.multi_reduction <maximumf>, %48, %cst_25 [0] : vector<4x8xf32> to vector<8xf32>
      %50 = vector.shape_cast %49 : vector<8xf32> to vector<1x8xf32>
      %c0_26 = arith.constant 0 : index
      %c0_27 = arith.constant 0 : index
      %51 = vector.load %arg6[%c0_26, %c0_27] : memref<4x8xf32, #tpu.memory_space<vmem>>, vector<4x8xf32>
      %52 = tpu.iota {dimensions = array<i32: 1>} : vector<4x8xi32>
      %c0_i32_28 = arith.constant 0 : i32
      %53 = vector.broadcast %c0_i32_28 : i32 to vector<4x8xi32>
      %54 = arith.cmpi eq, %52, %53 : vector<4x8xi32>
      %cst_29 = arith.constant 0xFF800000 : f32
      %55 = vector.broadcast %cst_29 : f32 to vector<4x8xf32>
      %56 = arith.select %54, %55, %51 : vector<4x8xi1>, vector<4x8xf32>
      %57 = vector.shape_cast %56 : vector<4x8xf32> to vector<4x1x8xf32>
      %58 = vector.shape_cast %56 : vector<4x8xf32> to vector<4x8x1xf32>
      %59 = vector.shape_cast %52 : vector<4x8xi32> to vector<4x1x8xi32>
      %60 = vector.shape_cast %52 : vector<4x8xi32> to vector<4x8x1xi32>
      %61 = vector.broadcast %57 : vector<4x1x8xf32> to vector<4x8x8xf32>
      %62 = vector.broadcast %58 : vector<4x8x1xf32> to vector<4x8x8xf32>
      %63 = arith.cmpf ogt, %61, %62 : vector<4x8x8xf32>
      %64 = vector.broadcast %57 : vector<4x1x8xf32> to vector<4x8x8xf32>
      %65 = vector.broadcast %58 : vector<4x8x1xf32> to vector<4x8x8xf32>
      %66 = arith.cmpf oeq, %64, %65 : vector<4x8x8xf32>
      %67 = vector.broadcast %59 : vector<4x1x8xi32> to vector<4x8x8xi32>
      %68 = vector.broadcast %60 : vector<4x8x1xi32> to vector<4x8x8xi32>
      %69 = arith.cmpi slt, %67, %68 : vector<4x8x8xi32>
      %70 = arith.andi %66, %69 : vector<4x8x8xi1>
      %71 = arith.ori %63, %70 : vector<4x8x8xi1>
      %72 = arith.extui %71 : vector<4x8x8xi1> to vector<4x8x8xi32>
      %cst_30 = arith.constant dense<0> : vector<4x8xi32>
      %73 = vector.multi_reduction <add>, %72, %cst_30 [2] : vector<4x8x8xi32> to vector<4x8xi32>
      %c4_i32_31 = arith.constant 4 : i32
      %74 = vector.broadcast %c4_i32_31 : i32 to vector<4x8xi32>
      %75 = arith.cmpi slt, %73, %74 : vector<4x8xi32>
      %76 = arith.extui %75 : vector<4x8xi1> to vector<4x8xi32>
      %77 = arith.sitofp %76 : vector<4x8xi32> to vector<4x8xf32>
      %cst_32 = arith.constant dense<0xFF800000> : vector<8xf32>
      %78 = vector.multi_reduction <maximumf>, %77, %cst_32 [0] : vector<4x8xf32> to vector<8xf32>
      %79 = vector.shape_cast %78 : vector<8xf32> to vector<1x8xf32>
      %80 = arith.maximumf %50, %79 : vector<1x8xf32>
      %81 = vector.extract_strided_slice %80 {offsets = [0, 1], sizes = [1, 7], strides = [1, 1]} : vector<1x8xf32> to vector<1x7xf32>
      %cst_33 = arith.constant 0.000000e+00 : f32
      %82 = vector.broadcast %cst_33 : f32 to vector<1x1xf32>
      %83 = tpu.concatenate %81, %82 in 1 : vector<1x7xf32>, vector<1x1xf32> -> vector<1x8xf32>
      %cst_34 = arith.constant 1.000000e+00 : f32
      %84 = vector.broadcast %cst_34 : f32 to vector<1x8xf32>
      %85 = arith.subf %84, %83 : vector<1x8xf32>
      %c0_35 = arith.constant 0 : index
      %c0_36 = arith.constant 0 : index
      %c0_37 = arith.constant 0 : index
      %86 = vector.load %arg4[%c0_35, %c0_36, %c0_37] : memref<1x2x8xf32, #tpu.memory_space<vmem>>, vector<1x1x8xf32>
      %87 = vector.shape_cast %86 : vector<1x1x8xf32> to vector<1x8xf32>
      %88 = vector.shape_cast %85 : vector<1x8xf32> to vector<1x1x8xf32>
      tpu.vector_store %arg4[%c0_35, %c0_36, %c0_37], %88 {strides = array<i32>} : memref<1x2x8xf32, #tpu.memory_space<vmem>>, vector<1x1x8xf32>,
      %c0_38 = arith.constant 0 : index
      %c1 = arith.constant 1 : index
      %c0_39 = arith.constant 0 : index
      %89 = vector.load %arg4[%c0_38, %c1, %c0_39] : memref<1x2x8xf32, #tpu.memory_space<vmem>>, vector<1x1x8xf32>
      %90 = vector.shape_cast %89 : vector<1x1x8xf32> to vector<1x8xf32>
      %91 = vector.shape_cast %83 : vector<1x8xf32> to vector<1x1x8xf32>
      tpu.vector_store %arg4[%c0_38, %c1, %c0_39], %91 {strides = array<i32>} : memref<1x2x8xf32, #tpu.memory_space<vmem>>, vector<1x1x8xf32>,
    } else {
    }
    return
  }
  func.func @transform_0(%arg0: i32, %arg1: i32) -> (i32, i32, i32, i32, i32) {
    %c2_i32 = arith.constant 2 : i32
    %0 = arith.subi %c2_i32, %arg1 : i32
    %c0_i32 = arith.constant 0 : i32
    %c0_i32_0 = arith.constant 0 : i32
    %c0_i32_1 = arith.constant 0 : i32
    %c0_i32_2 = arith.constant 0 : i32
    return %0, %arg0, %c0_i32, %c0_i32_0, %c0_i32_1 : i32, i32, i32, i32, i32
  }
  func.func @transform_1(%arg0: i32, %arg1: i32) -> (i32, i32, i32, i32, i32) {
    %c2_i32 = arith.constant 2 : i32
    %0 = arith.subi %c2_i32, %arg1 : i32
    %c0_i32 = arith.constant 0 : i32
    %c0_i32_0 = arith.constant 0 : i32
    %c0_i32_1 = arith.constant 0 : i32
    %c0_i32_2 = arith.constant 0 : i32
    return %0, %arg0, %c0_i32, %c0_i32_0, %c0_i32_1 : i32, i32, i32, i32, i32
  }
  func.func @transform_2(%arg0: i32, %arg1: i32) -> (i32, i32, i32) {
    %c0_i32 = arith.constant 0 : i32
    %c0_i32_0 = arith.constant 0 : i32
    %c0_i32_1 = arith.constant 0 : i32
    return %arg0, %c0_i32, %c0_i32_0 : i32, i32, i32
  }
}

</mosaic_0001>

<llo_original>
// kernel: tpu_custom_call.1
$region0: #{tpu_custom_call.1}
  #allocation0 [shape = 'u32[]', space=smem, size = 0x4, offset = 0x4, fixed_abs, tag = 'smem constant byte address 0x4 - core index']
  #allocation1 [shape = 'u32[144,128]{1,0:T(1,128)}', space=vmem, size = 0x12000, scoped, tag = 'internal scratch']
  #allocation2 [shape = 'f32[4,8]{1,0:T(4,128)}', space=vmem, size = 0x800, scoped, tag = 'scratch operand']
  #allocation3 [shape = 'f32[4,8]{1,0:T(4,128)}', space=vmem, size = 0x800, scoped, tag = 'scratch operand']
  %s0 = inlined_call_operand.hbm [shape: f32[3,2,4,8,8], index: 0, kind: input, shape index: {}]
  %s1 = inlined_call_operand.hbm [shape: f32[3,2,4,8,8], index: 1, kind: input, shape index: {}]
  %s2 = inlined_call_operand.hbm [shape: f32[2,2,8], index: 2, kind: output, shape index: {}]
  %s3 = sld [smem:[#allocation0]]
  $region57: #{tpu_custom_call.1} parent=0
    _
  %s5 = ssub.s32 1, %s3
  %s6 = scalar_select 0, %s5, %s3
  $region1: #{tpu_custom_call.1} parent=0
    #allocation4 [shape = 'u8[32768]{0}', space=vmem, size = 0x8000, scoped, tag = 'input window, operand 0']
    #allocation5 [shape = 's32[2]{0}', space=sflag, size = 0x8, scoped, tag = 'scoped memory for tpu_custom_call.1']
    #allocation6 [shape = 's32[2]{0}', space=sflag, size = 0x8, scoped, tag = 'scoped memory for tpu_custom_call.1']
    #allocation7 [shape = 'u8[32768]{0}', space=vmem, size = 0x8000, scoped, tag = 'input window, operand 1']
    #allocation8 [shape = 's32[2]{0}', space=sflag, size = 0x8, scoped, tag = 'scoped memory for tpu_custom_call.1']
    #allocation9 [shape = 'u8[2048]{0}', space=vmem, size = 0x800, scoped, tag = 'output window, operand 0']
    %7 = vsyncpa [#allocation5], 0
    %s8 = scalar_lea.sflag [#allocation5], 1
    %9 = vsyncpa %s8, 0
    %10 = vsyncpa [#allocation8], 0
    %s11 = scalar_lea.sflag [#allocation8], 1
    %12 = vsyncpa %s11, 0
    %13 = vsyncpa [#allocation6], 0
    %s14 = scalar_lea.sflag [#allocation6], 1
    %15 = vsyncpa %s14, 0
    loop: start=0, step=1, limit=8
    $region2: #{tpu_custom_call.1} parent=1 // loop_pre_header
      _
    $region3: #{tpu_custom_call.1} parent=1 // loop_header
      %s17 = sphi 0, %s21
      %p18 = scmp.ge.s32.totalorder %s17, 8
      %s24 = sphi 0, %s36
      %s25 = sphi 0, %s32
      %s26 = sphi 0, %s24
      %s27 = sphi 0, %s25
      %s28 = sphi 0, %s26
      %s29 = sphi 0, %s27
      %s43 = sphi 0, %s45
      %s46 = sphi 0, %s43
      %s47 = sphi 0, %s46
      %s63 = sphi 0, %s47
      %s73 = sphi 0, %s75
      %s76 = sphi 0, %s73
      %s77 = sphi 0, %s76
      %s93 = sphi 0, %s77
      %s99 = sphi 0, %s101
      %s102 = sphi 0, %s99
      %s103 = sphi 0, %s102
      %s119 = sphi 0, %s103
    $region4: #{tpu_custom_call.1} parent=1 // loop_header_branch
      %20 = sbr.rel (%p18) target = $region8
    $region5: #{tpu_custom_call.1} parent=1 // loop_body
      %s22 = ssub.s32 %s17, 1
      %s23 = ssub.s32 %s17, 2
      %s30 = sadd.s32 1, %s25
      %p31 = scmp.ge.s32.totalorder %s30, 3
      %s32 = scalar_select %p31, 0, %s30
      %s33 = sadd.s32 1, %s24
      %s34 = scalar_select %p31, %s33, %s24
      %p35 = scmp.ge.s32.totalorder %s34, 2
      %s36 = scalar_select %p35, 0, %s34
      %s37 = ssub.s32 2, %s25
      %s38 = ssub.s32 2, %s32
      %s39 = ssub.s32 %s37, %s38
      %s40 = ssub.s32 %s24, %s36
      %s41 = sor.u32 %s39, %s40
      %p42 = scmp.eq.s32.totalorder %s41, 0
      %s44 = sadd.s32 %s43, 1
      %s45 = scalar_select %p42, %s43, %s44
      %p48 = pneg %p42
      %p49 = scmp.eq.s32.totalorder %s17, 5
      %p50 = por %p48, %p49
      %p51 = scmp.ne.s32.totalorder %s43, %s46
      %p52 = scmp.eq.s32.totalorder %s17, 0
      %p53 = por %p51, %p52
      %p54 = scmp.ne.s32.totalorder %s43, %s46
      %p55 = scmp.eq.s32.totalorder %s22, 5
      %p56 = por %p54, %p55
      %p57 = scmp.ne.s32.totalorder %s46, %s47
      %p58 = scmp.eq.s32.totalorder %s22, 0
      %p59 = por %p57, %p58
      %p60 = scmp.ne.s32.totalorder %s46, %s47
      %p61 = scmp.eq.s32.totalorder %s23, 5
      %p62 = por %p60, %p61
      %p64 = scmp.ne.s32.totalorder %s47, %s63
      %p65 = scmp.eq.s32.totalorder %s23, 0
      %p66 = por %p64, %p65
      %s67 = ssub.s32 2, %s25
      %s68 = ssub.s32 2, %s32
      %s69 = ssub.s32 %s67, %s68
      %s70 = ssub.s32 %s24, %s36
      %s71 = sor.u32 %s69, %s70
      %p72 = scmp.eq.s32.totalorder %s71, 0
      %s74 = sadd.s32 %s73, 1
      %s75 = scalar_select %p72, %s73, %s74
      %p78 = pneg %p72
      %p79 = scmp.eq.s32.totalorder %s17, 5
      %p80 = por %p78, %p79
      %p81 = scmp.ne.s32.totalorder %s73, %s76
      %p82 = scmp.eq.s32.totalorder %s17, 0
      %p83 = por %p81, %p82
      %p84 = scmp.ne.s32.totalorder %s73, %s76
      %p85 = scmp.eq.s32.totalorder %s22, 5
      %p86 = por %p84, %p85
      %p87 = scmp.ne.s32.totalorder %s76, %s77
      %p88 = scmp.eq.s32.totalorder %s22, 0
      %p89 = por %p87, %p88
      %p90 = scmp.ne.s32.totalorder %s76, %s77
      %p91 = scmp.eq.s32.totalorder %s23, 5
      %p92 = por %p90, %p91
      %p94 = scmp.ne.s32.totalorder %s77, %s93
      %p95 = scmp.eq.s32.totalorder %s23, 0
      %p96 = por %p94, %p95
      %s97 = ssub.s32 %s24, %s36
      %p98 = scmp.eq.s32.totalorder %s97, 0
      %s100 = sadd.s32 %s99, 1
      %s101 = scalar_select %p98, %s99, %s100
      %p104 = pneg %p98
      %p105 = scmp.eq.s32.totalorder %s17, 5
      %p106 = por %p104, %p105
      %p107 = scmp.ne.s32.totalorder %s99, %s102
      %p108 = scmp.eq.s32.totalorder %s17, 0
      %p109 = por %p107, %p108
      %p110 = scmp.ne.s32.totalorder %s99, %s102
      %p111 = scmp.eq.s32.totalorder %s22, 5
      %p112 = por %p110, %p111
      %p113 = scmp.ne.s32.totalorder %s102, %s103
      %p114 = scmp.eq.s32.totalorder %s22, 0
      %p115 = por %p113, %p114
      %p116 = scmp.ne.s32.totalorder %s102, %s103
      %p117 = scmp.eq.s32.totalorder %s23, 5
      %p118 = por %p116, %p117
      %p120 = scmp.ne.s32.totalorder %s103, %s119
      %p121 = scmp.eq.s32.totalorder %s23, 0
      %p122 = por %p120, %p121
      %p123 = scmp.le.s32.totalorder 1, %s17
      %p124 = scmp.lt.s32.totalorder %s17, 7
      %p125 = pnand %p123, %p124
      %p126 = pneg %p125
      // Predicated region
      $region9: #{tpu_custom_call.1} parent=5 // pred_check
        _
      $region10: #{tpu_custom_call.1} parent=5 // pred_check_branch
        %128 = sbr.rel (%p125) target = $region12
      $region11: #{tpu_custom_call.1} parent=5 // pred_region
        %s129 = ssub.s32 %s17, 1
      $region12: #{tpu_custom_call.1} parent=5 // pred_fallthru
        _
      %p130 = scmp.lt.s32.totalorder %s17, 6
      // Predicated region
      $region13: #{tpu_custom_call.1} parent=5 // pred_check
        %p131 = pneg %p130
      $region14: #{tpu_custom_call.1} parent=5 // pred_check_branch
        %133 = sbr.rel (%p131) target = $region16
      $region15: #{tpu_custom_call.1} parent=5 // pred_region
        // Predicated region
        $region17: #{tpu_custom_call.1} parent=15 // pred_check
          %p134 = pneg %p53
        $region18: #{tpu_custom_call.1} parent=15 // pred_check_branch
          %136 = sbr.rel (%p134) target = $region20
        $region19: #{tpu_custom_call.1} parent=15 // pred_region
          %s137 = sand.u32 %s43, 1
          %s138 = scalar_lea.sflag [#allocation5], %s137
          %s139 = sand.u32 %s43, 1
          %s140 = smul.addr %s139, 32
          %s141 = scalar_lea.vmem [#allocation4], %s140
          %s142 = ssub.s32 2, %s25
          %s144 = ssub.s32 512, 512
          %145 = vsyncadd %s138, %s144
          %s146 = smul.addr %s24, 4
          %s147 = smul.addr %s142, 8
          %s148 = sadd.s32 %s146, %s147
          %s149 = smul.addr %s148, 128
          %s150 = scalar_lea.hbm %s0, %s149
          %s151 = sshll.u32 %s141, 4
          %s152 = int_to_ptr.vmem [resolvable:$true] %s151
          %157 = dma.hbm_to_vmem [thread:$0]  %s150, 512, %s152, %s138, 128, 128, 8
        $region20: #{tpu_custom_call.1} parent=15 // pred_fallthru
          _
        // Predicated region
        $region21: #{tpu_custom_call.1} parent=15 // pred_check
          %p158 = pneg %p83
        $region22: #{tpu_custom_call.1} parent=15 // pred_check_branch
          %160 = sbr.rel (%p158) target = $region24
        $region23: #{tpu_custom_call.1} parent=15 // pred_region
          %s161 = sand.u32 %s73, 1
          %s162 = scalar_lea.sflag [#allocation8], %s161
          %s163 = sand.u32 %s73, 1
          %s164 = smul.addr %s163, 32
          %s165 = scalar_lea.vmem [#allocation7], %s164
          %s166 = ssub.s32 2, %s25
          %s168 = ssub.s32 512, 512
          %169 = vsyncadd %s162, %s168
          %s170 = smul.addr %s24, 4
          %s171 = smul.addr %s166, 8
          %s172 = sadd.s32 %s170, %s171
          %s173 = smul.addr %s172, 128
          %s174 = scalar_lea.hbm %s1, %s173
          %s175 = sshll.u32 %s165, 4
          %s176 = int_to_ptr.vmem [resolvable:$true] %s175
          %181 = dma.hbm_to_vmem [thread:$0]  %s174, 512, %s176, %s162, 128, 128, 8
        $region24: #{tpu_custom_call.1} parent=15 // pred_fallthru
          _
      $region16: #{tpu_custom_call.1} parent=5 // pred_fallthru
        _
      %p182 = scmp.le.s32.totalorder 1, %s17
      %p183 = scmp.lt.s32.totalorder %s17, 7
      %p184 = pnand %p182, %p183
      %p185 = pneg %p184
      // Predicated region
      $region25: #{tpu_custom_call.1} parent=5 // pred_check
        _
      $region26: #{tpu_custom_call.1} parent=5 // pred_check_branch
        %187 = sbr.rel (%p184) target = $region28
      $region27: #{tpu_custom_call.1} parent=5 // pred_region
        %s188 = ssub.s32 %s17, 1
        %s189 = sand.u32 %s46, 1
        %s190 = scalar_lea.sflag [#allocation5], %s189
        %s191 = sand.u32 %s46, 1
        %s192 = smul.addr %s191, 32
        %s193 = scalar_lea.vmem [#allocation4], %s192
        // Predicated region
        $region29: #{tpu_custom_call.1} parent=27 // pred_check
          %p194 = pneg %p59
        $region30: #{tpu_custom_call.1} parent=27 // pred_check_branch
          %196 = sbr.rel (%p194) target = $region32
        $region31: #{tpu_custom_call.1} parent=27 // pred_region
          %197 = dma.done %s190, 512
        $region32: #{tpu_custom_call.1} parent=27 // pred_fallthru
          _
        %s198 = sand.u32 %s76, 1
        %s199 = scalar_lea.sflag [#allocation8], %s198
        %s200 = sand.u32 %s76, 1
        %s201 = smul.addr %s200, 32
        %s202 = scalar_lea.vmem [#allocation7], %s201
        // Predicated region
        $region33: #{tpu_custom_call.1} parent=27 // pred_check
          %p203 = pneg %p89
        $region34: #{tpu_custom_call.1} parent=27 // pred_check_branch
          %205 = sbr.rel (%p203) target = $region36
        $region35: #{tpu_custom_call.1} parent=27 // pred_region
          %206 = dma.done %s199, 512
        $region36: #{tpu_custom_call.1} parent=27 // pred_fallthru
          _
        %s207 = sand.u32 %s46, 1
        %s208 = scalar_lea.sflag [#allocation5], %s207
        %s209 = sand.u32 %s46, 1
        %s210 = smul.addr %s209, 32
        %s211 = scalar_lea.vmem [#allocation4], %s210
        %p212 = pneg %p59
        %p213 = pneg %p56
        %s214 = sand.u32 %s76, 1
        %s215 = scalar_lea.sflag [#allocation8], %s214
        %s216 = sand.u32 %s76, 1
        %s217 = smul.addr %s216, 32
        %s218 = scalar_lea.vmem [#allocation7], %s217
        %p219 = pneg %p89
        %p220 = pneg %p86
        %p221 = pneg %p115
        %p222 = pneg %p112
        %s223 = sand.u32 %s102, 1
        %s224 = scalar_lea.sflag [#allocation6], %s223
        %s225 = sand.u32 %s102, 1
        %s226 = smul.addr %s225, 2
        %s227 = scalar_lea.vmem [#allocation9], %s226
        %s228 = ssub.s32 2, %s27
        %s229 = ssub.s32 2, %s27
        %p230 = scmp.eq.s32.totalorder %s27, 0
        // Predicated region
        $region37: #{tpu_custom_call.1} parent=27 // pred_check
          %p231 = pneg %p230
        $region38: #{tpu_custom_call.1} parent=27 // pred_check_branch
          %233 = sbr.rel (%p231) target = $region40
        $region39: #{tpu_custom_call.1} parent=27 // pred_region
          %v234 = vlaneseq
          %v235 = vand.u32 %v234, 127
          %vm236 = vcmp.eq.s32.totalorder %v235, 0
          %v237 = vsel %vm236, 1, 0
          %v238 = vcvt.s32.f32 %v237
          %vm239 = vcmask 60416
          %240 = vst.msk [vmem:[#allocation2] sm:$0xf] %vm239, %v238
          %241 = vst.msk [vmem:[#allocation3] sm:$0xf] %vm239, %v238
        $region40: #{tpu_custom_call.1} parent=27 // pred_fallthru
          _
        %v242 = vld [vmem:[#allocation2] sm:$0xf]
        %v243 = vlaneseq
        %v244 = vshrl.u32 %v243, 7
        %v245 = vsub.s32 0, %v244
        %v246 = vrot.slane %v242, %v245
        %248 = vbcast.lane.b32.xlu0 %v246, 256
        %v249 = vpop.permute.xlu0 %248
        %v250 = vlaneseq
        %v251 = vshrl.u32 %v250, 7
        %v252 = vsub.s32 1, %v251
        %v253 = vrot.slane %v242, %v252
        %255 = vbcast.lane.b32.xlu0 %v253, 256
        %v256 = vpop.permute.xlu0 %255
        %v257 = vlaneseq
        %v258 = vshrl.u32 %v257, 7
        %v259 = vsub.s32 2, %v258
        %v260 = vrot.slane %v242, %v259
        %262 = vbcast.lane.b32.xlu0 %v260, 256
        %v263 = vpop.permute.xlu0 %262
        %v264 = vlaneseq
        %v265 = vshrl.u32 %v264, 7
        %v266 = vsub.s32 3, %v265
        %v267 = vrot.slane %v242, %v266
        %269 = vbcast.lane.b32.xlu0 %v267, 256
        %v270 = vpop.permute.xlu0 %269
        %v271 = vld [vmem:[%s193] sm:$0xff]
        %v272 = vld [vmem:[%s193 + $0x8] sm:$0xff]
        %v273 = vld [vmem:[%s193 + $0x10] sm:$0xff]
        %v274 = vld [vmem:[%s193 + $0x18] sm:$0xff]
        %v275 = vmul.f32 %v249, %v271
        %v276 = vmul.f32 %v256, %v272
        %v277 = vmul.f32 %v263, %v273
        %v278 = vmul.f32 %v270, %v274
        %vm279 = vcmask 64512
        %v280 = vsel %vm279, %v275, 0.0
        %v281 = vrot.slane %v280, 4
        %v282 = vadd.f32 %v280, %v281
        %v283 = vrot.slane %v282, 2
        %v284 = vadd.f32 %v282, %v283
        %v285 = vrot.slane %v284, 1
        %v286 = vadd.f32 %v284, %v285
        %v287 = vsel %vm279, %v276, 0.0
        %v288 = vrot.slane %v287, 4
        %v289 = vadd.f32 %v287, %v288
        %v290 = vrot.slane %v289, 2
        %v291 = vadd.f32 %v289, %v290
        %v292 = vrot.slane %v291, 1
        %v293 = vadd.f32 %v291, %v292
        %v294 = vsel %vm279, %v277, 0.0
        %v295 = vrot.slane %v294, 4
        %v296 = vadd.f32 %v294, %v295
        %v297 = vrot.slane %v296, 2
        %v298 = vadd.f32 %v296, %v297
        %v299 = vrot.slane %v298, 1
        %v300 = vadd.f32 %v298, %v299
        %v301 = vsel %vm279, %v278, 0.0
        %v302 = vrot.slane %v301, 4
        %v303 = vadd.f32 %v301, %v302
        %v304 = vrot.slane %v303, 2
        %v305 = vadd.f32 %v303, %v304
        %v306 = vrot.slane %v305, 1
        %v307 = vadd.f32 %v305, %v306
        %vm312 = vcmask 1041409
        %v313 = vsel %vm312, %v293, %v286
        %vm314 = vcmask 1042434
        %v315 = vsel %vm314, %v300, %v313
        %vm316 = vcmask 1043459
        %v317 = vsel %vm316, %v307, %v315
        %vm319 = vcmask 60416
        %320 = vst.msk [vmem:[#allocation2] sm:$0xf] %vm319, %v317
        %v321 = vld [vmem:[#allocation3] sm:$0xf]
        %v322 = vlaneseq
        %v323 = vshrl.u32 %v322, 7
        %v324 = vsub.s32 0, %v323
        %v325 = vrot.slane %v321, %v324
        %327 = vbcast.lane.b32.xlu0 %v325, 256
        %v328 = vpop.permute.xlu0 %327
        %v329 = vlaneseq
        %v330 = vshrl.u32 %v329, 7
        %v331 = vsub.s32 1, %v330
        %v332 = vrot.slane %v321, %v331
        %334 = vbcast.lane.b32.xlu0 %v332, 256
        %v335 = vpop.permute.xlu0 %334
        %v336 = vlaneseq
        %v337 = vshrl.u32 %v336, 7
        %v338 = vsub.s32 2, %v337
        %v339 = vrot.slane %v321, %v338
        %341 = vbcast.lane.b32.xlu0 %v339, 256
        %v342 = vpop.permute.xlu0 %341
        %v343 = vlaneseq
        %v344 = vshrl.u32 %v343, 7
        %v345 = vsub.s32 3, %v344
        %v346 = vrot.slane %v321, %v345
        %348 = vbcast.lane.b32.xlu0 %v346, 256
        %v349 = vpop.permute.xlu0 %348
        %v350 = vld [vmem:[%s202] sm:$0xff]
        %v351 = vld [vmem:[%s202 + $0x8] sm:$0xff]
        %v352 = vld [vmem:[%s202 + $0x10] sm:$0xff]
        %v353 = vld [vmem:[%s202 + $0x18] sm:$0xff]
        %v354 = vmul.f32 %v328, %v350
        %v355 = vmul.f32 %v335, %v351
        %v356 = vmul.f32 %v342, %v352
        %v357 = vmul.f32 %v349, %v353
        %v358 = vsel %vm279, %v354, 0.0
        %v359 = vrot.slane %v358, 4
        %v360 = vadd.f32 %v358, %v359
        %v361 = vrot.slane %v360, 2
        %v362 = vadd.f32 %v360, %v361
        %v363 = vrot.slane %v362, 1
        %v364 = vadd.f32 %v362, %v363
        %v365 = vsel %vm279, %v355, 0.0
        %v366 = vrot.slane %v365, 4
        %v367 = vadd.f32 %v365, %v366
        %v368 = vrot.slane %v367, 2
        %v369 = vadd.f32 %v367, %v368
        %v370 = vrot.slane %v369, 1
        %v371 = vadd.f32 %v369, %v370
        %v372 = vsel %vm279, %v356, 0.0
        %v373 = vrot.slane %v372, 4
        %v374 = vadd.f32 %v372, %v373
        %v375 = vrot.slane %v374, 2
        %v376 = vadd.f32 %v374, %v375
        %v377 = vrot.slane %v376, 1
        %v378 = vadd.f32 %v376, %v377
        %v379 = vsel %vm279, %v357, 0.0
        %v380 = vrot.slane %v379, 4
        %v381 = vadd.f32 %v379, %v380
        %v382 = vrot.slane %v381, 2
        %v383 = vadd.f32 %v381, %v382
        %v384 = vrot.slane %v383, 1
        %v385 = vadd.f32 %v383, %v384
        %v390 = vsel %vm312, %v371, %v364
        %v391 = vsel %vm314, %v378, %v390
        %v392 = vsel %vm316, %v385, %v391
        %394 = vst.msk [vmem:[#allocation3] sm:$0xf] %vm319, %v392
        %p395 = scmp.eq.s32.totalorder %s27, 2
        // Predicated region
        $region41: #{tpu_custom_call.1} parent=27 // pred_check
          %p396 = pneg %p395
        $region42: #{tpu_custom_call.1} parent=27 // pred_check_branch
          %398 = sbr.rel (%p396) target = $region44
        $region43: #{tpu_custom_call.1} parent=27 // pred_region
          %v399 = vld [vmem:[#allocation2] sm:$0xf]
          %v400 = vlaneseq
          %v401 = vand.u32 %v400, 127
          %vm402 = vcmp.eq.s32.totalorder %v401, 0
          %v403 = vsel %vm402, -inf, %v399
          %v406 = vunpack.c.l.s4 1966171168
          %v407 = vunpack.c.0.s8 %v406
          %v408 = vlaneseq
          %v409 = vshrl.u32 %v408, 7
          %v410 = vsub.s32 %v407, %v409
          %v411 = vrot.slane %v403, %v410
          %v412 = vcombine.high %v411, %v411
          %v414 = vunpack.c.l.s4 1966171168
          %v415 = vunpack.c.0.s8 %v414
          %v416 = vlaneseq
          %v417 = vshrl.u32 %v416, 7
          %v418 = vsub.s32 %v415, %v417
          %v419 = vrot.slane %v411, %v418
          %v421 = vunpack.c.l.s4 1966171168
          %v422 = vunpack.c.0.s8 %v421
          %v423 = vlaneseq
          %v424 = vshrl.u32 %v423, 7
          %v425 = vsub.s32 %v422, %v424
          %v426 = vrot.slane %v412, %v425
          %v427 = vcombine.high %v419, %v419
          %v428 = vcombine.high %v426, %v426
          %v429 = vlaneseq
          %v430 = vshrl.u32 %v429, 7
          %v431 = vsub.s32 0, %v430
          %v432 = vrot.slane %v403, %v431
          %434 = vbcast.lane.b32.xlu0 %v432, 256
          %v435 = vpop.permute.xlu0 %434
          %v436 = vlaneseq
          %v437 = vshrl.u32 %v436, 7
          %v438 = vsub.s32 1, %v437
          %v439 = vrot.slane %v403, %v438
          %441 = vbcast.lane.b32.xlu0 %v439, 256
          %v442 = vpop.permute.xlu0 %441
          %v443 = vlaneseq
          %v444 = vshrl.u32 %v443, 7
          %v445 = vsub.s32 2, %v444
          %v446 = vrot.slane %v403, %v445
          %448 = vbcast.lane.b32.xlu0 %v446, 256
          %v449 = vpop.permute.xlu0 %448
          %v450 = vlaneseq
          %v451 = vshrl.u32 %v450, 7
          %v452 = vsub.s32 3, %v451
          %v453 = vrot.slane %v403, %v452
          %455 = vbcast.lane.b32.xlu0 %v453, 256
          %v456 = vpop.permute.xlu0 %455
          %v458 = vunpack.c.l.s4 1966171168
          %v459 = vunpack.c.0.s8 %v458
          %v460 = vlaneseq
          %v461 = vshrl.u32 %v460, 7
          %v462 = vsub.s32 %v459, %v461
          %v463 = vrot.slane %v401, %v462
          %v464 = vcombine.high %v463, %v463
          %v466 = vunpack.c.l.s4 1966171168
          %v467 = vunpack.c.0.s8 %v466
          %v468 = vlaneseq
          %v469 = vshrl.u32 %v468, 7
          %v470 = vsub.s32 %v467, %v469
          %v471 = vrot.slane %v463, %v470
          %v473 = vunpack.c.l.s4 1966171168
          %v474 = vunpack.c.0.s8 %v473
          %v475 = vlaneseq
          %v476 = vshrl.u32 %v475, 7
          %v477 = vsub.s32 %v474, %v476
          %v478 = vrot.slane %v464, %v477
          %v479 = vcombine.high %v471, %v471
          %v480 = vcombine.high %v478, %v478
          %482 = vbcast.lane.b32.xlu0 %v401, 256
          %v483 = vpop.permute.xlu0 %482
          %v484 = vlaneseq
          %v485 = vshrl.u32 %v484, 7
          %v486 = vsub.s32 0, %v485
          %v487 = vrot.slane %v419, %v486
          %v488 = vlaneseq
          %v489 = vshrl.u32 %v488, 7
          %v490 = vsub.s32 0, %v489
          %v491 = vrot.slane %v426, %v490
          %v492 = vlaneseq
          %v493 = vshrl.u32 %v492, 7
          %v494 = vsub.s32 0, %v493
          %v495 = vrot.slane %v427, %v494
          %v496 = vlaneseq
          %v497 = vshrl.u32 %v496, 7
          %v498 = vsub.s32 0, %v497
          %v499 = vrot.slane %v428, %v498
          %vm504 = vcmp.gt.f32.partialorder %v487, %v435
          %vm505 = vcmp.gt.f32.partialorder %v491, %v442
          %vm506 = vcmp.gt.f32.partialorder %v495, %v449
          %vm507 = vcmp.gt.f32.partialorder %v499, %v456
          %vm508 = vcmp.eq.f32.partialorder %v487, %v435
          %vm509 = vcmp.eq.f32.partialorder %v491, %v442
          %vm510 = vcmp.eq.f32.partialorder %v495, %v449
          %vm511 = vcmp.eq.f32.partialorder %v499, %v456
          %v512 = vlaneseq
          %v513 = vshrl.u32 %v512, 7
          %v514 = vsub.s32 0, %v513
          %v515 = vrot.slane %v471, %v514
          %v516 = vlaneseq
          %v517 = vshrl.u32 %v516, 7
          %v518 = vsub.s32 0, %v517
          %v519 = vrot.slane %v478, %v518
          %v520 = vlaneseq
          %v521 = vshrl.u32 %v520, 7
          %v522 = vsub.s32 0, %v521
          %v523 = vrot.slane %v479, %v522
          %v524 = vlaneseq
          %v525 = vshrl.u32 %v524, 7
          %v526 = vsub.s32 0, %v525
          %v527 = vrot.slane %v480, %v526
          %vm528 = vcmp.lt.s32.totalorder %v515, %v483
          %vm529 = vcmp.lt.s32.totalorder %v519, %v483
          %vm530 = vcmp.lt.s32.totalorder %v523, %v483
          %vm531 = vcmp.lt.s32.totalorder %v527, %v483
          %vm532 = vmand %vm508, %vm528
          %vm533 = vmand %vm509, %vm529
          %vm534 = vmand %vm510, %vm530
          %vm535 = vmand %vm511, %vm531
          %vm536 = vmor %vm504, %vm532
          %vm537 = vmor %vm505, %vm533
          %vm538 = vmor %vm506, %vm534
          %vm539 = vmor %vm507, %vm535
          %v540 = vsel %vm536, 1, 0
          %v541 = vsel %vm537, 1, 0
          %v542 = vsel %vm538, 1, 0
          %v543 = vsel %vm539, 1, 0
          %v544 = vsel %vm279, %v540, 0
          %v545 = vand.u32 %v544, 65535
          %v546 = vshrl.u32 %v544, 16
          %v547 = vcvt.s32.f32 %v545
          %v548 = vcvt.s32.f32 %v546
          %549 = vadd.xlane.f32.xlu0 %v547
          %v550 = vpop.xlane.xlu0 %549
          %551 = vadd.xlane.f32.xlu0 %v548
          %v552 = vpop.xlane.xlu0 %551
          %v553 = vcvt.f32.s32 %v550
          %v554 = vcvt.f32.s32 %v552
          %v555 = vshll.u32 %v554, 16
          %v556 = vadd.s32 %v555, %v553
          %v557 = vsel %vm279, %v541, 0
          %v558 = vand.u32 %v557, 65535
          %v559 = vshrl.u32 %v557, 16
          %v560 = vcvt.s32.f32 %v558
          %v561 = vcvt.s32.f32 %v559
          %562 = vadd.xlane.f32.xlu0 %v560
          %v563 = vpop.xlane.xlu0 %562
          %564 = vadd.xlane.f32.xlu0 %v561
          %v565 = vpop.xlane.xlu0 %564
          %v566 = vcvt.f32.s32 %v563
          %v567 = vcvt.f32.s32 %v565
          %v568 = vshll.u32 %v567, 16
          %v569 = vadd.s32 %v568, %v566
          %v570 = vsel %vm279, %v542, 0
          %v571 = vand.u32 %v570, 65535
          %v572 = vshrl.u32 %v570, 16
          %v573 = vcvt.s32.f32 %v571
          %v574 = vcvt.s32.f32 %v572
          %575 = vadd.xlane.f32.xlu0 %v573
          %v576 = vpop.xlane.xlu0 %575
          %577 = vadd.xlane.f32.xlu0 %v574
          %v578 = vpop.xlane.xlu0 %577
          %v579 = vcvt.f32.s32 %v576
          %v580 = vcvt.f32.s32 %v578
          %v581 = vshll.u32 %v580, 16
          %v582 = vadd.s32 %v581, %v579
          %v583 = vsel %vm279, %v543, 0
          %v584 = vand.u32 %v583, 65535
          %v585 = vshrl.u32 %v583, 16
          %v586 = vcvt.s32.f32 %v584
          %v587 = vcvt.s32.f32 %v585
          %588 = vadd.xlane.f32.xlu0 %v586
          %v589 = vpop.xlane.xlu0 %588
          %590 = vadd.xlane.f32.xlu0 %v587
          %v591 = vpop.xlane.xlu0 %590
          %v592 = vcvt.f32.s32 %v589
          %v593 = vcvt.f32.s32 %v591
          %v594 = vshll.u32 %v593, 16
          %v595 = vadd.s32 %v594, %v592
          %vm596 = vcmp.lt.s32.totalorder %v556, 4
          %vm597 = vcmp.lt.s32.totalorder %v569, 4
          %vm598 = vcmp.lt.s32.totalorder %v582, 4
          %vm599 = vcmp.lt.s32.totalorder %v595, 4
          %v600 = vsel %vm596, 1, 0
          %v601 = vsel %vm597, 1, 0
          %v602 = vsel %vm598, 1, 0
          %v603 = vsel %vm599, 1, 0
          %v604 = vcvt.s32.f32 %v600
          %v605 = vcvt.s32.f32 %v601
          %v606 = vcvt.s32.f32 %v602
          %v607 = vcvt.s32.f32 %v603
          %v608 = vmax.f32 %v604, %v605
          %v609 = vmax.f32 %v606, %v607
          %v610 = vmax.f32 %v608, %v609
          %v611 = vld [vmem:[#allocation3] sm:$0xf]
          %v612 = vsel %vm402, -inf, %v611
          %v615 = vunpack.c.l.s4 1966171168
          %v616 = vunpack.c.0.s8 %v615
          %v617 = vlaneseq
          %v618 = vshrl.u32 %v617, 7
          %v619 = vsub.s32 %v616, %v618
          %v620 = vrot.slane %v612, %v619
          %v621 = vcombine.high %v620, %v620
          %v623 = vunpack.c.l.s4 1966171168
          %v624 = vunpack.c.0.s8 %v623
          %v625 = vlaneseq
          %v626 = vshrl.u32 %v625, 7
          %v627 = vsub.s32 %v624, %v626
          %v628 = vrot.slane %v620, %v627
          %v630 = vunpack.c.l.s4 1966171168
          %v631 = vunpack.c.0.s8 %v630
          %v632 = vlaneseq
          %v633 = vshrl.u32 %v632, 7
          %v634 = vsub.s32 %v631, %v633
          %v635 = vrot.slane %v621, %v634
          %v636 = vcombine.high %v628, %v628
          %v637 = vcombine.high %v635, %v635
          %v638 = vlaneseq
          %v639 = vshrl.u32 %v638, 7
          %v640 = vsub.s32 0, %v639
          %v641 = vrot.slane %v612, %v640
          %643 = vbcast.lane.b32.xlu0 %v641, 256
          %v644 = vpop.permute.xlu0 %643
          %v645 = vlaneseq
          %v646 = vshrl.u32 %v645, 7
          %v647 = vsub.s32 1, %v646
          %v648 = vrot.slane %v612, %v647
          %650 = vbcast.lane.b32.xlu0 %v648, 256
          %v651 = vpop.permute.xlu0 %650
          %v652 = vlaneseq
          %v653 = vshrl.u32 %v652, 7
          %v654 = vsub.s32 2, %v653
          %v655 = vrot.slane %v612, %v654
          %657 = vbcast.lane.b32.xlu0 %v655, 256
          %v658 = vpop.permute.xlu0 %657
          %v659 = vlaneseq
          %v660 = vshrl.u32 %v659, 7
          %v661 = vsub.s32 3, %v660
          %v662 = vrot.slane %v612, %v661
          %664 = vbcast.lane.b32.xlu0 %v662, 256
          %v665 = vpop.permute.xlu0 %664
          %v666 = vlaneseq
          %v667 = vshrl.u32 %v666, 7
          %v668 = vsub.s32 0, %v667
          %v669 = vrot.slane %v628, %v668
          %v670 = vlaneseq
          %v671 = vshrl.u32 %v670, 7
          %v672 = vsub.s32 0, %v671
          %v673 = vrot.slane %v635, %v672
          %v674 = vlaneseq
          %v675 = vshrl.u32 %v674, 7
          %v676 = vsub.s32 0, %v675
          %v677 = vrot.slane %v636, %v676
          %v678 = vlaneseq
          %v679 = vshrl.u32 %v678, 7
          %v680 = vsub.s32 0, %v679
          %v681 = vrot.slane %v637, %v680
          %vm686 = vcmp.gt.f32.partialorder %v669, %v644
          %vm687 = vcmp.gt.f32.partialorder %v673, %v651
          %vm688 = vcmp.gt.f32.partialorder %v677, %v658
          %vm689 = vcmp.gt.f32.partialorder %v681, %v665
          %vm690 = vcmp.eq.f32.partialorder %v669, %v644
          %vm691 = vcmp.eq.f32.partialorder %v673, %v651
          %vm692 = vcmp.eq.f32.partialorder %v677, %v658
          %vm693 = vcmp.eq.f32.partialorder %v681, %v665
          %vm694 = vmand %vm690, %vm528
          %vm695 = vmand %vm691, %vm529
          %vm696 = vmand %vm692, %vm530
          %vm697 = vmand %vm693, %vm531
          %vm698 = vmor %vm686, %vm694
          %vm699 = vmor %vm687, %vm695
          %vm700 = vmor %vm688, %vm696
          %vm701 = vmor %vm689, %vm697
          %v702 = vsel %vm698, 1, 0
          %v703 = vsel %vm699, 1, 0
          %v704 = vsel %vm700, 1, 0
          %v705 = vsel %vm701, 1, 0
          %v706 = vsel %vm279, %v702, 0
          %v707 = vand.u32 %v706, 65535
          %v708 = vshrl.u32 %v706, 16
          %v709 = vcvt.s32.f32 %v707
          %v710 = vcvt.s32.f32 %v708
          %711 = vadd.xlane.f32.xlu0 %v709
          %v712 = vpop.xlane.xlu0 %711
          %713 = vadd.xlane.f32.xlu0 %v710
          %v714 = vpop.xlane.xlu0 %713
          %v715 = vcvt.f32.s32 %v712
          %v716 = vcvt.f32.s32 %v714
          %v717 = vshll.u32 %v716, 16
          %v718 = vadd.s32 %v717, %v715
          %v719 = vsel %vm279, %v703, 0
          %v720 = vand.u32 %v719, 65535
          %v721 = vshrl.u32 %v719, 16
          %v722 = vcvt.s32.f32 %v720
          %v723 = vcvt.s32.f32 %v721
          %724 = vadd.xlane.f32.xlu0 %v722
          %v725 = vpop.xlane.xlu0 %724
          %726 = vadd.xlane.f32.xlu0 %v723
          %v727 = vpop.xlane.xlu0 %726
          %v728 = vcvt.f32.s32 %v725
          %v729 = vcvt.f32.s32 %v727
          %v730 = vshll.u32 %v729, 16
          %v731 = vadd.s32 %v730, %v728
          %v732 = vsel %vm279, %v704, 0
          %v733 = vand.u32 %v732, 65535
          %v734 = vshrl.u32 %v732, 16
          %v735 = vcvt.s32.f32 %v733
          %v736 = vcvt.s32.f32 %v734
          %737 = vadd.xlane.f32.xlu0 %v735
          %v738 = vpop.xlane.xlu0 %737
          %739 = vadd.xlane.f32.xlu0 %v736
          %v740 = vpop.xlane.xlu0 %739
          %v741 = vcvt.f32.s32 %v738
          %v742 = vcvt.f32.s32 %v740
          %v743 = vshll.u32 %v742, 16
          %v744 = vadd.s32 %v743, %v741
          %v745 = vsel %vm279, %v705, 0
          %v746 = vand.u32 %v745, 65535
          %v747 = vshrl.u32 %v745, 16
          %v748 = vcvt.s32.f32 %v746
          %v749 = vcvt.s32.f32 %v747
          %750 = vadd.xlane.f32.xlu0 %v748
          %v751 = vpop.xlane.xlu0 %750
          %752 = vadd.xlane.f32.xlu0 %v749
          %v753 = vpop.xlane.xlu0 %752
          %v754 = vcvt.f32.s32 %v751
          %v755 = vcvt.f32.s32 %v753
          %v756 = vshll.u32 %v755, 16
          %v757 = vadd.s32 %v756, %v754
          %vm758 = vcmp.lt.s32.totalorder %v718, 4
          %vm759 = vcmp.lt.s32.totalorder %v731, 4
          %vm760 = vcmp.lt.s32.totalorder %v744, 4
          %vm761 = vcmp.lt.s32.totalorder %v757, 4
          %v762 = vsel %vm758, 1, 0
          %v763 = vsel %vm759, 1, 0
          %v764 = vsel %vm760, 1, 0
          %v765 = vsel %vm761, 1, 0
          %v766 = vcvt.s32.f32 %v762
          %v767 = vcvt.s32.f32 %v763
          %v768 = vcvt.s32.f32 %v764
          %v769 = vcvt.s32.f32 %v765
          %v770 = vmax.f32 %v766, %v767
          %v771 = vmax.f32 %v768, %v769
          %v772 = vmax.f32 %v770, %v771
          %v773 = vmax.f32 %v610, %v772
          %v775 = vadd.s32 %v401, 1
          %v776 = vlaneseq
          %v777 = vshrl.u32 %v776, 7
          %v778 = vsub.s32 %v775, %v777
          %v779 = vrot.slane %v773, %v778
          %vm781 = vcmask 56320
          %v782 = vsel %vm781, %v779, 0.0
          %v783 = vsub.f32 1.0, %v782
          %vm784 = vcmask 58369
          %785 = vst.msk [vmem:[%s227 - $0x1] sm:$0x2] %vm784, %v783
          %786 = vst.msk [vmem:[%s227] sm:$0x2] %vm784, %v782
        $region44: #{tpu_custom_call.1} parent=27 // pred_fallthru
          _
        %s787 = sand.u32 %s102, 1
        %s788 = scalar_lea.sflag [#allocation6], %s787
        %s789 = sand.u32 %s102, 1
        %s790 = smul.addr %s789, 2
        %s791 = scalar_lea.vmem [#allocation9], %s790
        // Predicated region
        $region45: #{tpu_custom_call.1} parent=27 // pred_check
          %p792 = pneg %p112
        $region46: #{tpu_custom_call.1} parent=27 // pred_check_branch
          %794 = sbr.rel (%p792) target = $region48
        $region47: #{tpu_custom_call.1} parent=27 // pred_region
          %s796 = ssub.s32 32, 32
          %797 = vsyncadd %s788, %s796
          %s798 = smul.addr %s26, 32
          %s799 = scalar_lea.hbm %s2, %s798
          %s801 = sshll.u32 %s791, 4
          %s802 = int_to_ptr.vmem [resolvable:$true] %s801
          %804 = dma.vmem_to_hbm [thread:$0]  %s802, 32, %s799, %s788
        $region48: #{tpu_custom_call.1} parent=27 // pred_fallthru
          _
      $region28: #{tpu_custom_call.1} parent=5 // pred_fallthru
        _
      %p805 = scmp.le.s32.totalorder 2, %s17
      // Predicated region
      $region49: #{tpu_custom_call.1} parent=5 // pred_check
        %p806 = pneg %p805
      $region50: #{tpu_custom_call.1} parent=5 // pred_check_branch
        %808 = sbr.rel (%p806) target = $region52
      $region51: #{tpu_custom_call.1} parent=5 // pred_region
        %s809 = ssub.s32 %s17, 2
        // Predicated region
        $region53: #{tpu_custom_call.1} parent=51 // pred_check
          %p810 = pneg %p118
        $region54: #{tpu_custom_call.1} parent=51 // pred_check_branch
          %812 = sbr.rel (%p810) target = $region56
        $region55: #{tpu_custom_call.1} parent=51 // pred_region
          %s813 = sand.u32 %s103, 1
          %s814 = scalar_lea.sflag [#allocation6], %s813
          %s815 = sand.u32 %s103, 1
          %s816 = smul.addr %s815, 2
          %s817 = scalar_lea.vmem [#allocation9], %s816
          %818 = dma.done %s814, 32
        $region56: #{tpu_custom_call.1} parent=51 // pred_fallthru
          _
      $region52: #{tpu_custom_call.1} parent=5 // pred_fallthru
        _
    $region6: #{tpu_custom_call.1} parent=1 // loop_footer
      %s21 = sadd.s32 1, %s17
    $region7: #{tpu_custom_call.1} parent=1 // loop_footer_branch
      %16 = sbr.rel target = $region3
    $region8: #{tpu_custom_call.1} parent=1 // loop_exit
      _
    %819 = vsyncpa [#allocation5], 1
    %s820 = scalar_lea.sflag [#allocation5], 1
    %821 = vsyncpa %s820, 1
    %822 = vsyncpa [#allocation8], 1
    %s823 = scalar_lea.sflag [#allocation8], 1
    %824 = vsyncpa %s823, 1
    %825 = vsyncpa [#allocation6], 1
    %s826 = scalar_lea.sflag [#allocation6], 1
    %827 = vsyncpa %s826, 1

</llo_original>
